<compile_context>
chip_gen: v7x
topology: tpu7x:2x2x1
jax: 0.10.0
libtpu: 0.0.40
codegen_flags: <defaults>
</compile_context>

<pallas_src>
import math

import jax
import jax.numpy as jnp
from jax.experimental import pallas as pl
from jax.experimental.pallas import tpu as pltpu


def _layer_scale_kernel(x_ref, scale_ref, o_ref):
    # x_ref:     (TM, Dk) VMEM tile
    # scale_ref: (1, Dk)  VMEM tile, resident across all grid steps
    # o_ref:     (TM, Dk) VMEM tile
    o_ref[...] = x_ref[...] * scale_ref[...]


def _generation_defaults():
    """(target_block_bytes, vmem_limit_cap) tuned per TPU generation."""
    try:
        info = pltpu.get_tpu_info()
        vmem_cap = getattr(info, "vmem_capacity_bytes", None)
    except Exception:
        vmem_cap = None
    if vmem_cap is not None and vmem_cap <= 64 * 1024 * 1024:
        # v7x-like: 64 MiB VMEM / TC but ~3.2 TB/s HBM.  Bigger blocks amortize
        # the ~0.35us per-grid-step overhead; cap scoped VMEM below physical.
        return 8 * 1024 * 1024, 48 * 1024 * 1024
    # v5e / v6e (128 MiB VMEM): 4 MiB blocks are already at the ~86% roofline
    # plateau; larger tiles just add VMEM pressure.
    return 4 * 1024 * 1024, 64 * 1024 * 1024


def _maybe_fold_lanes(x2d, scale2d):
    """Fold k rows into one lane-dense row when D is not a multiple of 128."""
    rows, d = x2d.shape
    if d % 128 == 0:
        return x2d, scale2d
    k = math.lcm(d, 128) // d
    if k <= 1 or rows % k != 0:
        return x2d, scale2d  # last dim stays the full-array extent (legal)
    x_f = x2d.reshape(rows // k, k * d)
    s_f = jnp.tile(scale2d, (1, k))
    return x_f, s_f


def _choose_row_tile(rows, d, itemsize, target_block_bytes):
    """Pick TM: ~target_block_bytes per (TM, D) block, sublane-aligned,
    preferring a divisor of `rows` and keeping the grid >= 2 steps."""
    # sublane packing: 8 rows for 4-byte, 16 for 2-byte, 32 for 1-byte dtypes
    sublane = max(8, 32 // max(itemsize, 1))
    tm_target = target_block_bytes // max(d * itemsize, 1)
    tm_target = max(sublane, (tm_target // sublane) * sublane)
    # Keep at least 2 grid steps when possible so both v7x TensorCores get work
    # and in/out DMA double-buffering has something to overlap.
    if rows > sublane:
        half = max(sublane, ((rows // 2) // sublane) * sublane)
        tm_target = min(tm_target, half)
    tm_target = min(tm_target, rows)
    # Prefer the largest sublane-aligned divisor of rows <= tm_target (no tail).
    if rows % sublane == 0:
        t = tm_target - (tm_target % sublane)
        tries = 4096
        while t >= sublane and tries > 0:
            if rows % t == 0:
                return t
            t -= sublane
            tries -= 1
    return max(1, tm_target)


def layer_scale(x, scale, fn=None, *, target_block_bytes=None,
                donate_input=None):
    """Pallas implementation of LayerScale.forward: fn(x) * scale.

    x:     (..., D) array (typically (B, N, D))
    scale: (1, 1, D) parameter (broadcast over all leading dims)
    fn:    optional callable applied to x first (plain JAX glue); identity if None.
    donate_input: alias the (flattened) input HBM buffer as the output.  Default
      (None) enables it automatically when `fn` is given (fn(x) is provably a
      dead intermediate) and disables it otherwise.
    """
    if donate_input is None:
        donate_input = fn is not None
    if fn is not None:
        x = fn(x)

    orig_shape = x.shape
    D = orig_shape[-1]
    assert scale.shape[-1] == D, "scale last dim must match x last dim"

    # Keep the multiply in x's dtype (see module header note on promotion).
    scale2d = jnp.asarray(scale, dtype=x.dtype).reshape(1, D)

    # Flatten leading dims and (optionally) fold rows for lane density.
    x2d = x.reshape(-1, D)
    x2d, scale2d = _maybe_fold_lanes(x2d, scale2d)
    rows, Dk = x2d.shape
    itemsize = jnp.dtype(x.dtype).itemsize

    gen_block_bytes, vmem_cap_limit = _generation_defaults()
    if target_block_bytes is None:
        target_block_bytes = gen_block_bytes
    # Never request a block whose double-buffered in+out set exceeds the cap.
    target_block_bytes = min(target_block_bytes,
                             max(64 * 1024, (vmem_cap_limit - (2 << 20)) // 4))

    tm = _choose_row_tile(rows, Dk, itemsize, target_block_bytes)
    grid = (pl.cdiv(rows, tm),)

    # Scoped VMEM: double-buffered in + out blocks plus the resident scale,
    # with headroom, capped generation-aware (leave slack below physical VMEM).
    block_bytes = tm * Dk * itemsize
    vmem_limit = int(min(vmem_cap_limit,
                         max(32 * 1024 * 1024, 4 * block_bytes + (2 << 20))))

    kwargs = {}
    if donate_input:
        # Reuse the (dead) input HBM buffer for the output.
        kwargs["input_output_aliases"] = {0: 0}

    total_elems = rows * Dk
    cost = pl.CostEstimate(
        flops=int(total_elems),
        transcendentals=0,
        bytes_accessed=int(2 * total_elems * itemsize + Dk * itemsize),
    )

    out2d = pl.pallas_call(
        _layer_scale_kernel,
        out_shape=jax.ShapeDtypeStruct((rows, Dk), x.dtype),
        grid_spec=pltpu.PrefetchScalarGridSpec(
            num_scalar_prefetch=0,
            grid=grid,
            in_specs=[
                pl.BlockSpec((tm, Dk), lambda i: (i, 0)),
                pl.BlockSpec((1, Dk), lambda i: (0, 0)),
            ],
            out_specs=pl.BlockSpec((tm, Dk), lambda i: (i, 0)),
        ),
        compiler_params=pltpu.CompilerParams(
            dimension_semantics=("parallel",),
            vmem_limit_bytes=vmem_limit,
        ),
        cost_estimate=cost,
        **kwargs,
    )(x2d, scale2d)

    return out2d.reshape(orig_shape)


def make_layer_scale_params(dim, depth, dtype=jnp.float32):
    """Deterministic parameter init matching LayerScale.__init__."""
    if depth <= 18:
        init_eps = 0.1
    elif depth <= 24:
        init_eps = 1e-5
    else:
        init_eps = 1e-6
    return jnp.full((1, 1, dim), init_eps, dtype=dtype)


if __name__ == "__main__":
    key = jax.random.PRNGKey(0)
    k1, k2, k3 = jax.random.split(key, 3)

    # 1) Small demo shapes consistent with the module's (b, n, d) convention.
    #    D=32 also exercises the lane-density fold (16 rows -> 4 rows of 128).
    B, N, D = 2, 8, 32
    depth = 12  # -> init_eps = 0.1
    x = jax.random.normal(k1, (B, N, D), dtype=jnp.float32)
    scale = make_layer_scale_params(D, depth)
    out = jax.block_until_ready(layer_scale(x, scale, fn=None))
    ref = x * scale
    assert out.shape == (B, N, D)
    assert jnp.allclose(out, ref, atol=1e-6, rtol=1e-6)

    # 2) Multi-block grid with a non-dividing row count (tail-tile path) and a
    #    lane-dense D=128.
    B2, N2, D2 = 3, 100, 128
    x2 = jax.random.normal(k2, (B2, N2, D2), dtype=jnp.float32)
    scale2 = make_layer_scale_params(D2, depth)
    out2 = jax.block_until_ready(
        layer_scale(x2, scale2, fn=None, target_block_bytes=64 * 1024))
    ref2 = x2 * scale2
    assert out2.shape == (B2, N2, D2)
    assert jnp.allclose(out2, ref2, atol=1e-6, rtol=1e-6)

    # 3) Wrapped-fn path (auto input/output aliasing of the dead fn(x) buffer).
    B3, N3, D3 = 2, 16, 64
    x3 = jax.random.normal(k3, (B3, N3, D3), dtype=jnp.float32)
    scale3 = make_layer_scale_params(D3, depth)
    fn = lambda t: t * 2.0 + 1.0
    out3 = jax.block_until_ready(layer_scale(x3, scale3, fn=fn))
    ref3 = fn(x3) * scale3
    assert out3.shape == (B3, N3, D3)
    assert jnp.allclose(out3, ref3, atol=1e-6, rtol=1e-6)

    print("KERNEL_OK")
</pallas_src>

<mosaic_0001>
module attributes {stable_mosaic.version = 11 : i64} {
  func.func @_layer_scale_kernel(%arg0: i32, %arg1: memref<4x128xf32, #tpu.memory_space<vmem>>, %arg2: memref<1x128xf32, #tpu.memory_space<vmem>>, %arg3: memref<4x128xf32, #tpu.memory_space<vmem>>) attributes {dimension_semantics = [#tpu.dimension_semantics<parallel>], iteration_bounds = array<i64: 1>, scalar_prefetch = 0 : i64, scratch_operands = 0 : i64, tpu.core_type = #tpu.core_type<tc>, window_params = [{transform_indices = @transform_0, window_bounds = array<i64: 4, 128>}, {pipeline_mode = #tpu.pipeline_mode<synchronous>, transform_indices = @transform_1, window_bounds = array<i64: 1, 128>}, {transform_indices = @transform_2, window_bounds = array<i64: 4, 128>}]} {
    %c0 = arith.constant 0 : index
    %c0_0 = arith.constant 0 : index
    %0 = vector.load %arg1[%c0, %c0_0] : memref<4x128xf32, #tpu.memory_space<vmem>>, vector<4x128xf32>
    %c0_1 = arith.constant 0 : index
    %c0_2 = arith.constant 0 : index
    %1 = vector.load %arg2[%c0_1, %c0_2] : memref<1x128xf32, #tpu.memory_space<vmem>>, vector<1x128xf32>
    %2 = vector.broadcast %1 : vector<1x128xf32> to vector<4x128xf32>
    %3 = arith.mulf %0, %2 : vector<4x128xf32>
    %c0_3 = arith.constant 0 : index
    %c0_4 = arith.constant 0 : index
    %4 = vector.load %arg3[%c0_3, %c0_4] : memref<4x128xf32, #tpu.memory_space<vmem>>, vector<4x128xf32>
    tpu.vector_store %arg3[%c0_3, %c0_4], %3 {strides = array<i32>} : memref<4x128xf32, #tpu.memory_space<vmem>>, vector<4x128xf32>,
    return
  }
  func.func @transform_0(%arg0: i32) -> (i32, i32) {
    %c0_i32 = arith.constant 0 : i32
    %c0_i32_0 = arith.constant 0 : i32
    return %arg0, %c0_i32 : i32, i32
  }
  func.func @transform_1(%arg0: i32) -> (i32, i32) {
    %c0_i32 = arith.constant 0 : i32
    %c0_i32_0 = arith.constant 0 : i32
    %c0_i32_1 = arith.constant 0 : i32
    return %c0_i32, %c0_i32_0 : i32, i32
  }
  func.func @transform_2(%arg0: i32) -> (i32, i32) {
    %c0_i32 = arith.constant 0 : i32
    %c0_i32_0 = arith.constant 0 : i32
    return %arg0, %c0_i32 : i32, i32
  }
}

</mosaic_0001>

<llo_original>
// kernel: tpu_custom_call.1
$region0: #{tpu_custom_call.1}
  #allocation0 [shape = 'u32[]', space=smem, size = 0x4, offset = 0x4, fixed_abs, tag = 'smem constant byte address 0x4 - core index']
  #allocation1 [shape = 'u32[144,128]{1,0:T(1,128)}', space=vmem, size = 0x12000, scoped, tag = 'internal scratch']
  %s0 = inlined_call_operand.hbm [shape: f32[4,128], index: 0, kind: input, shape index: {}]
  %s1 = inlined_call_operand.vmem [shape: f32[1,128], index: 1, kind: input, shape index: {}]
  %s2 = inlined_call_operand.hbm [shape: f32[4,128], index: 2, kind: output, shape index: {}]
  %s3 = sld [smem:[#allocation0]]
  $region22: #{tpu_custom_call.1} parent=0
    _
  %s5 = ssub.s32 1, %s3
  %s6 = scalar_select 0, %s5, %s3
  $region1: #{tpu_custom_call.1} parent=0
    #allocation2 [shape = 'u8[2048]{0}', space=vmem, size = 0x800, scoped, tag = 'input window, operand 0, single buffered']
    #allocation3 [shape = 's32[1]{0}', space=sflag, size = 0x4, scoped, tag = 'scoped memory for tpu_custom_call.1']
    #allocation4 [shape = 's32[1]{0}', space=sflag, size = 0x4, scoped, tag = 'scoped memory for tpu_custom_call.1']
    #allocation5 [shape = 'u8[2048]{0}', space=vmem, size = 0x800, scoped, tag = 'output window, operand 0, single buffered']
    %7 = vsyncpa [#allocation3], 0
    %8 = vsyncpa [#allocation4], 0
    // Predicated region
    $region2: #{tpu_custom_call.1} parent=1 // pred_check
      _
    $region3: #{tpu_custom_call.1} parent=1 // pred_check_branch
      %10 = sbr.rel (0) target = $region5
    $region4: #{tpu_custom_call.1} parent=1 // pred_region
      %s12 = ssub.s32 64, 64
      %13 = vsyncadd [#allocation3], %s12
      %s15 = sshll.u32 [#allocation2], 4
      %s16 = int_to_ptr.vmem [resolvable:$true] %s15
      %18 = dma.hbm_to_vmem [thread:$0]  %s0, 64, %s16, [#allocation3]
    $region5: #{tpu_custom_call.1} parent=1 // pred_fallthru
      _
    // Predicated region
    $region6: #{tpu_custom_call.1} parent=1 // pred_check
      _
    $region7: #{tpu_custom_call.1} parent=1 // pred_check_branch
      %20 = sbr.rel (0) target = $region9
    $region8: #{tpu_custom_call.1} parent=1 // pred_region
      _
    $region9: #{tpu_custom_call.1} parent=1 // pred_fallthru
      _
    // Predicated region
    $region10: #{tpu_custom_call.1} parent=1 // pred_check
      _
    $region11: #{tpu_custom_call.1} parent=1 // pred_check_branch
      %22 = sbr.rel (0) target = $region13
    $region12: #{tpu_custom_call.1} parent=1 // pred_region
      %23 = dma.done [#allocation3], 64
    $region13: #{tpu_custom_call.1} parent=1 // pred_fallthru
      _
    %v24 = vld [vmem:[#allocation2] sm:$0xf]
    %v25 = vld [vmem:[%s1] sm:$0x1]
    %v27 = vlaneseq
    %v28 = vshrl.u32 %v27, 7
    %v29 = vsub.s32 0, %v28
    %v30 = vrot.slane %v25, %v29
    %v32 = vmul.f32 %v24, %v30
    %33 = vst [vmem:[#allocation5] sm:$0xf] %v32
    // Predicated region
    $region14: #{tpu_custom_call.1} parent=1 // pred_check
      _
    $region15: #{tpu_custom_call.1} parent=1 // pred_check_branch
      %35 = sbr.rel (0) target = $region17
    $region16: #{tpu_custom_call.1} parent=1 // pred_region
      %s37 = ssub.s32 64, 64
      %38 = vsyncadd [#allocation4], %s37
      %s40 = sshll.u32 [#allocation5], 4
      %s41 = int_to_ptr.vmem [resolvable:$true] %s40
      %43 = dma.vmem_to_hbm [thread:$0]  %s41, 64, %s2, [#allocation4]
    $region17: #{tpu_custom_call.1} parent=1 // pred_fallthru
      _
    // Predicated region
    $region18: #{tpu_custom_call.1} parent=1 // pred_check
      _
    $region19: #{tpu_custom_call.1} parent=1 // pred_check_branch
      %45 = sbr.rel (0) target = $region21
    $region20: #{tpu_custom_call.1} parent=1 // pred_region
      %46 = dma.done [#allocation4], 64
    $region21: #{tpu_custom_call.1} parent=1 // pred_fallthru
      _
    %47 = vsyncpa [#allocation3], 1
    %48 = vsyncpa [#allocation4], 1

</llo_original>
